<compile_context>
chip_gen: v6e
topology: v6e:2x2x1
jax: 0.10.0
libtpu: 0.0.40
codegen_flags: <defaults>
</compile_context>

<pallas_src>
import jax
import jax.numpy as jnp
from jax import lax
from jax.experimental import pallas as pl
from jax.experimental.pallas import tpu as pltpu

NEG_SLOPE = 0.2
BN_EPS = 1e-5
K = 7                      # conv kernel size
STRIDE = 2                 # poolstride
N_BRANCH = 4               # number of GNN_conv_upsample branches
BRANCHES_PER_STEP = 4      # all branches fused per grid step -> grid = (1,)


# ----------------------------- Pallas kernel -------------------------------
def upsample_kernel(x_ref,
                    w1_ref, b1_ref, g1_ref, be1_ref,
                    w2_ref, b2_ref, g2_ref, be2_ref,
                    wt_ref, bt_ref, g3_ref, be3_ref,
                    out_ref):
    """One grid step processes BRANCHES_PER_STEP branches fused on the lane axis.

    x_ref  : (1, B, L, Ci)            fused input  (Ci = nb*cnn_in_ch)
    w1_ref : (1, K*Ci, Ch)            block-diag im2col weight, conv1
    w2_ref : (1, K*Ch, Ch)            block-diag im2col weight, conv2
    wt_ref : (1, 4*Ch, 2*Co)          fused deconv weight, cols = [even | odd]
    out_ref: (1, B, L, 2*Co)          lanes ordered (parity, branch, cout)
    """
    f32 = jnp.float32
    _, B, L, Ci = x_ref.shape
    Ch = w1_ref.shape[2]
    Co = g3_ref.shape[2]

    def im2col(h, pad_left, pad_right, n_taps):
        # h: (B, L, C) -> (B*L, n_taps*C); tap j reads h_pad[:, j:j+L, :]
        Bh, Lh, C = h.shape
        zl = jnp.zeros((Bh, pad_left, C), f32)
        zr = jnp.zeros((Bh, pad_right, C), f32)
        hp = jnp.concatenate([zl, h, zr], axis=1)
        cols = jnp.concatenate([hp[:, j:j + Lh, :] for j in range(n_taps)],
                               axis=-1)
        return cols.reshape(Bh * Lh, n_taps * C)

    def bn_lrelu(y, gamma, beta):
        # training-mode BatchNorm1d (biased variance) + LeakyReLU, per channel
        mean = jnp.mean(y, axis=0, keepdims=True)
        var = jnp.mean(jnp.square(y - mean), axis=0, keepdims=True)
        yn = (y - mean) * lax.rsqrt(var + BN_EPS) * gamma + beta
        return jnp.where(yn > 0, yn, NEG_SLOPE * yn)

    x = x_ref[0].astype(f32)                                      # (B, L, Ci)

    # ---- Conv1d(Ci -> Ch, k=7, pad=3): single im2col matmul ---------------
    h = jnp.dot(im2col(x, 3, 3, K), w1_ref[0],
                preferred_element_type=f32) + b1_ref[0]           # (B*L, Ch)
    h = bn_lrelu(h, g1_ref[0], be1_ref[0])

    # ---- Conv1d(Ch -> Ch, k=7, pad=3) --------------------------------------
    h = jnp.dot(im2col(h.reshape(B, L, Ch), 3, 3, K), w2_ref[0],
                preferred_element_type=f32) + b2_ref[0]           # (B*L, Ch)
    h = bn_lrelu(h, g2_ref[0], be2_ref[0])

    # ---- ConvTranspose1d(Ch -> Co, k=7, s=2, p=3, op=1) --------------------
    #   out[2m]   uses taps k=1,3,5   at inputs l = m+1, m, m-1
    #   out[2m+1] uses taps k=0,2,4,6 at inputs l = m+2, m+1, m, m-1
    # im2col offsets 0..3 read h[m-1 .. m+2]; fused weight columns are
    # [even outputs | odd outputs], so one matmul yields both parities.
    y = jnp.dot(im2col(h.reshape(B, L, Ch), 1, 2, 4), wt_ref[0],
                preferred_element_type=f32) + bt_ref[0]           # (B*L, 2*Co)

    # joint BN over the full upsampled sequence (both parities), per channel
    ye = y[:, :Co]
    yo = y[:, Co:]
    mean = 0.5 * (jnp.mean(ye, axis=0, keepdims=True)
                  + jnp.mean(yo, axis=0, keepdims=True))
    var = 0.5 * (jnp.mean(jnp.square(ye - mean), axis=0, keepdims=True)
                 + jnp.mean(jnp.square(yo - mean), axis=0, keepdims=True))
    scale = lax.rsqrt(var + BN_EPS) * g3_ref[0]                   # (1, Co)
    shift = be3_ref[0] - mean * scale
    sc = jnp.concatenate([scale, scale], axis=-1)                 # (1, 2*Co)
    sh = jnp.concatenate([shift, shift], axis=-1)
    yn = y * sc + sh
    out_ref[0] = jnp.where(yn > 0, yn, NEG_SLOPE * yn).reshape(B, L, 2 * Co)


# ------------------- one-time parameter preparation (setup) -----------------
def prepare_upsample_params(params):
    """Pre-permute / block-diag-fuse torch-layout weights into kernel layout.
    Call ONCE at model setup; the result is fed to upsample_pallas."""
    (w1, b1, g1, be1, w2, b2, g2, be2, wt, bt, g3, be3) = params
    f32 = jnp.float32
    nbp = BRANCHES_PER_STEP
    G = N_BRANCH // nbp

    # torch layouts -> (branch, tap, in_ch, out_ch)
    w1k = jnp.transpose(w1, (0, 3, 2, 1)).astype(f32)   # (4, K, Cin, C2)
    w2k = jnp.transpose(w2, (0, 3, 2, 1)).astype(f32)   # (4, K, C2,  C2)
    wtk = jnp.transpose(wt, (0, 3, 1, 2)).astype(f32)   # (4, K, C2,  Cout)

    def conv_blockdiag(wk_pair):
        # (nbp, K, Ci, Co) -> (K*nbp*Ci, nbp*Co) block-diagonal per tap
        nb, K_, Ci, Co = wk_pair.shape
        blocks = []
        for k in range(K_):
            rows = []
            for i in range(nb):
                row = [wk_pair[i, k] if j == i else jnp.zeros((Ci, Co), f32)
                       for j in range(nb)]
                rows.append(jnp.concatenate(row, axis=1))
            blocks.append(jnp.concatenate(rows, axis=0))
        return jnp.concatenate(blocks, axis=0)

    def deconv_fused(wt_pair):
        # (nbp, K, C2, Cout) -> (4*nbp*C2, 2*nbp*Cout); 4 input offsets,
        # output columns ordered (parity, branch, cout).
        nb, K_, Ci, Co = wt_pair.shape
        Cf, Cof = nb * Ci, nb * Co
        W = jnp.zeros((4, Cf, 2, Cof), f32)
        even_taps = {2: 1, 1: 3, 0: 5}          # offset -> kernel tap
        odd_taps = {3: 0, 2: 2, 1: 4, 0: 6}
        for i in range(nb):
            for off, k in even_taps.items():
                W = W.at[off, i * Ci:(i + 1) * Ci, 0,
                         i * Co:(i + 1) * Co].set(wt_pair[i, k])
            for off, k in odd_taps.items():
                W = W.at[off, i * Ci:(i + 1) * Ci, 1,
                         i * Co:(i + 1) * Co].set(wt_pair[i, k])
        return W.reshape(4 * Cf, 2 * Cof)

    def fuse_vec(v):                 # (4, C) -> (G, 1, nbp*C), branch-major
        return v.reshape(G, nbp * v.shape[1]).astype(f32)[:, None, :]

    w1f = jnp.stack([conv_blockdiag(w1k[g * nbp:(g + 1) * nbp]) for g in range(G)])
    w2f = jnp.stack([conv_blockdiag(w2k[g * nbp:(g + 1) * nbp]) for g in range(G)])
    wtf = jnp.stack([deconv_fused(wtk[g * nbp:(g + 1) * nbp]) for g in range(G)])

    b1f, g1f, be1f = fuse_vec(b1), fuse_vec(g1), fuse_vec(be1)
    b2f, g2f, be2f = fuse_vec(b2), fuse_vec(g2), fuse_vec(be2)
    btp = fuse_vec(bt)                                   # (G, 1, nbp*Cout)
    btf = jnp.concatenate([btp, btp], axis=-1)           # tiled over parity
    g3f, be3f = fuse_vec(g3), fuse_vec(be3)              # (G, 1, nbp*Cout)

    return (w1f, b1f, g1f, be1f, w2f, b2f, g2f, be2f, wtf, btf, g3f, be3f)


# ------------------------------- wrapper ------------------------------------
@jax.jit
def upsample_pallas(x, prepared):
    """x: (4*bsize, cnn_in_ch, L) PyTorch NCL layout.  prepared: output of
    prepare_upsample_params.  Returns (4*bsize, cnn_out_ch, L*STRIDE)."""
    (w1f, b1f, g1f, be1f, w2f, b2f, g2f, be2f, wtf, btf, g3f, be3f) = prepared
    NB, Cin, L = x.shape
    B = NB // N_BRANCH
    G = w1f.shape[0]
    nbp = N_BRANCH // G
    Cof2 = wtf.shape[2]                 # 2 * nbp * Cout  (parity-major lanes)
    Cout = Cof2 // (2 * nbp)
    Lo = L * STRIDE
    f32 = jnp.float32

    # batch regroup: branch br = g*nbp+i processes x[br::4] -> (G, B, L, nbp*Cin)
    xg = (x.reshape(B, G, nbp, Cin, L)
           .transpose(1, 0, 4, 2, 3)
           .reshape(G, B, L, nbp * Cin).astype(f32))

    inputs = (xg, w1f, b1f, g1f, be1f, w2f, b2f, g2f, be2f, wtf, btf, g3f, be3f)

    def bspec(a):
        nd = a.ndim
        return pl.BlockSpec((1,) + a.shape[1:],
                            lambda g, _n=nd: (g,) + (0,) * (_n - 1))

    out_sds = jax.ShapeDtypeStruct((G, B, L, Cof2), f32)
    out_spec = pl.BlockSpec((1, B, L, Cof2), lambda g: (g, 0, 0, 0))

    y = pl.pallas_call(
        upsample_kernel,
        out_shape=out_sds,
        grid_spec=pltpu.PrefetchScalarGridSpec(
            num_scalar_prefetch=0,
            grid=(G,),
            in_specs=[bspec(a) for a in inputs],
            out_specs=out_spec,
        ),
        compiler_params=pltpu.CompilerParams(
            dimension_semantics=("arbitrary",)),   # single fused step
    )(*inputs)

    # (G, B, L, parity, nb, Cout) -> (B, G, nb, Cout, L, parity) -> NCL
    y = y.reshape(G, B, L, 2, nbp, Cout).transpose(1, 0, 4, 5, 2, 3)
    return y.reshape(NB, Cout, Lo)


# ----------------------- pure-JAX reference (for checking) ------------------
def _branch_ref(xb, w1, b1, g1, be1, w2, b2, g2, be2, wt, bt, g3, be3):
    dn = ('NCH', 'OIH', 'NCH')

    def conv1d(h, w, b, pad):
        o = lax.conv_general_dilated(h, w, (1,), [(pad, pad)],
                                     dimension_numbers=dn,
                                     precision=lax.Precision.HIGHEST)
        return o + b[None, :, None]

    def bn_lrelu(h, g, be):
        m = jnp.mean(h, axis=(0, 2), keepdims=True)
        v = jnp.mean((h - m) ** 2, axis=(0, 2), keepdims=True)
        hn = (h - m) / jnp.sqrt(v + BN_EPS) * g[None, :, None] + be[None, :, None]
        return jnp.where(hn > 0, hn, NEG_SLOPE * hn)

    h = bn_lrelu(conv1d(xb, w1, b1, 3), g1, be1)
    h = bn_lrelu(conv1d(h, w2, b2, 3), g2, be2)
    rhs = jnp.flip(jnp.transpose(wt, (1, 0, 2)), axis=-1)
    h3 = lax.conv_general_dilated(h, rhs, (1,), [(3, 3 + STRIDE - 1)],
                                  lhs_dilation=(STRIDE,),
                                  dimension_numbers=dn,
                                  precision=lax.Precision.HIGHEST)
    return bn_lrelu(h3 + bt[None, :, None], g3, be3)


def upsample_ref(x, params):
    NB, _, L = x.shape
    Cout = params[9].shape[1]
    outs = [_branch_ref(x[br::4], *(p[br] for p in params)) for br in range(4)]
    return jnp.stack(outs, axis=1).reshape(NB, Cout, L * STRIDE)


if __name__ == "__main__":
    bsize = 2
    cnn_in_ch = 4
    cnn_out_ch = 4
    poolstride = 2
    gnn_out_ch = 16                    # output sequence length
    L = gnn_out_ch // poolstride       # input sequence length
    C2 = 2 * cnn_out_ch

    key = jax.random.PRNGKey(0)
    kx, kp = jax.random.split(key)
    x = jax.random.normal(kx, (bsize * 4, cnn_in_ch, L), jnp.float32)

    ks = jax.random.split(kp, 12)

    def uni(k, shape, fan):
        bound = 1.0 / (fan ** 0.5)
        return jax.random.uniform(k, shape, jnp.float32, -bound, bound)

    w1 = uni(ks[0], (4, C2, cnn_in_ch, K), cnn_in_ch * K)
    b1 = uni(ks[1], (4, C2), cnn_in_ch * K)
    g1 = 1.0 + 0.1 * jax.random.normal(ks[2], (4, C2), jnp.float32)
    be1 = 0.1 * jax.random.normal(ks[3], (4, C2), jnp.float32)
    w2 = uni(ks[4], (4, C2, C2, K), C2 * K)
    b2 = uni(ks[5], (4, C2), C2 * K)
    g2 = 1.0 + 0.1 * jax.random.normal(ks[6], (4, C2), jnp.float32)
    be2 = 0.1 * jax.random.normal(ks[7], (4, C2), jnp.float32)
    wt = uni(ks[8], (4, C2, cnn_out_ch, K), C2 * K)   # ConvTranspose1d (in, out, K)
    bt = uni(ks[9], (4, cnn_out_ch), C2 * K)
    g3 = 1.0 + 0.1 * jax.random.normal(ks[10], (4, cnn_out_ch), jnp.float32)
    be3 = 0.1 * jax.random.normal(ks[11], (4, cnn_out_ch), jnp.float32)

    params = (w1, b1, g1, be1, w2, b2, g2, be2, wt, bt, g3, be3)

    # one-time setup: permute / fuse weights into kernel layout
    prepared = prepare_upsample_params(params)

    y = jax.block_until_ready(upsample_pallas(x, prepared))
    assert y.shape == (bsize * 4, cnn_out_ch, gnn_out_ch), y.shape

    y_ref = upsample_ref(x, params)
    err = float(jnp.max(jnp.abs(y - y_ref)))
    assert err < 1e-3, f"mismatch vs reference: {err}"

    print("KERNEL_OK")
</pallas_src>

<mosaic_0001>
module attributes {stable_mosaic.version = 11 : i64} {
  func.func @upsample_kernel(%arg0: i32, %arg1: memref<1x2x8x16xf32, #tpu.memory_space<vmem>>, %arg2: memref<1x112x32xf32, #tpu.memory_space<vmem>>, %arg3: memref<1x1x32xf32, #tpu.memory_space<vmem>>, %arg4: memref<1x1x32xf32, #tpu.memory_space<vmem>>, %arg5: memref<1x1x32xf32, #tpu.memory_space<vmem>>, %arg6: memref<1x224x32xf32, #tpu.memory_space<vmem>>, %arg7: memref<1x1x32xf32, #tpu.memory_space<vmem>>, %arg8: memref<1x1x32xf32, #tpu.memory_space<vmem>>, %arg9: memref<1x1x32xf32, #tpu.memory_space<vmem>>, %arg10: memref<1x128x32xf32, #tpu.memory_space<vmem>>, %arg11: memref<1x1x32xf32, #tpu.memory_space<vmem>>, %arg12: memref<1x1x16xf32, #tpu.memory_space<vmem>>, %arg13: memref<1x1x16xf32, #tpu.memory_space<vmem>>, %arg14: memref<1x2x8x32xf32, #tpu.memory_space<vmem>>) attributes {dimension_semantics = [#tpu.dimension_semantics<arbitrary>], iteration_bounds = array<i64: 1>, scalar_prefetch = 0 : i64, scratch_operands = 0 : i64, tpu.core_type = #tpu.core_type<tc>, window_params = [{transform_indices = @transform_0, window_bounds = array<i64: 1, 2, 8, 16>}, {transform_indices = @transform_1, window_bounds = array<i64: 1, 112, 32>}, {transform_indices = @transform_2, window_bounds = array<i64: 1, 1, 32>}, {transform_indices = @transform_3, window_bounds = array<i64: 1, 1, 32>}, {transform_indices = @transform_4, window_bounds = array<i64: 1, 1, 32>}, {transform_indices = @transform_5, window_bounds = array<i64: 1, 224, 32>}, {transform_indices = @transform_6, window_bounds = array<i64: 1, 1, 32>}, {transform_indices = @transform_7, window_bounds = array<i64: 1, 1, 32>}, {transform_indices = @transform_8, window_bounds = array<i64: 1, 1, 32>}, {transform_indices = @transform_9, window_bounds = array<i64: 1, 128, 32>}, {transform_indices = @transform_10, window_bounds = array<i64: 1, 1, 32>}, {transform_indices = @transform_11, window_bounds = array<i64: 1, 1, 16>}, {transform_indices = @transform_12, window_bounds = array<i64: 1, 1, 16>}, {transform_indices = @transform_13, window_bounds = array<i64: 1, 2, 8, 32>}]} {
    %c0 = arith.constant 0 : index
    %c0_0 = arith.constant 0 : index
    %c0_1 = arith.constant 0 : index
    %c0_2 = arith.constant 0 : index
    %0 = vector.load %arg1[%c0, %c0_0, %c0_1, %c0_2] : memref<1x2x8x16xf32, #tpu.memory_space<vmem>>, vector<1x2x8x16xf32>
    %1 = vector.shape_cast %0 : vector<1x2x8x16xf32> to vector<2x8x16xf32>
    %cst = arith.constant 0.000000e+00 : f32
    %2 = vector.broadcast %cst : f32 to vector<2x3x16xf32>
    %cst_3 = arith.constant 0.000000e+00 : f32
    %3 = vector.broadcast %cst_3 : f32 to vector<2x3x16xf32>
    %4 = tpu.concatenate %2, %1, %3 in 1 : vector<2x3x16xf32>, vector<2x8x16xf32>, vector<2x3x16xf32> -> vector<2x14x16xf32>
    %5 = vector.extract_strided_slice %4 {offsets = [0, 0, 0], sizes = [2, 8, 16], strides = [1, 1, 1]} : vector<2x14x16xf32> to vector<2x8x16xf32>
    %6 = vector.extract_strided_slice %4 {offsets = [0, 1, 0], sizes = [2, 8, 16], strides = [1, 1, 1]} : vector<2x14x16xf32> to vector<2x8x16xf32>
    %7 = vector.extract_strided_slice %4 {offsets = [0, 2, 0], sizes = [2, 8, 16], strides = [1, 1, 1]} : vector<2x14x16xf32> to vector<2x8x16xf32>
    %8 = vector.extract_strided_slice %4 {offsets = [0, 3, 0], sizes = [2, 8, 16], strides = [1, 1, 1]} : vector<2x14x16xf32> to vector<2x8x16xf32>
    %9 = vector.extract_strided_slice %4 {offsets = [0, 4, 0], sizes = [2, 8, 16], strides = [1, 1, 1]} : vector<2x14x16xf32> to vector<2x8x16xf32>
    %10 = vector.extract_strided_slice %4 {offsets = [0, 5, 0], sizes = [2, 8, 16], strides = [1, 1, 1]} : vector<2x14x16xf32> to vector<2x8x16xf32>
    %11 = vector.extract_strided_slice %4 {offsets = [0, 6, 0], sizes = [2, 8, 16], strides = [1, 1, 1]} : vector<2x14x16xf32> to vector<2x8x16xf32>
    %12 = tpu.concatenate %5, %6, %7, %8, %9, %10, %11 in 2 : vector<2x8x16xf32>, vector<2x8x16xf32>, vector<2x8x16xf32>, vector<2x8x16xf32>, vector<2x8x16xf32>, vector<2x8x16xf32>, vector<2x8x16xf32> -> vector<2x8x112xf32>
    %13 = vector.shape_cast %12 : vector<2x8x112xf32> to vector<16x112xf32>
    %c0_4 = arith.constant 0 : index
    %c0_5 = arith.constant 0 : index
    %c0_6 = arith.constant 0 : index
    %14 = vector.load %arg2[%c0_4, %c0_5, %c0_6] : memref<1x112x32xf32, #tpu.memory_space<vmem>>, vector<1x112x32xf32>
    %15 = vector.shape_cast %14 : vector<1x112x32xf32> to vector<112x32xf32>
    %cst_7 = arith.constant dense<0.000000e+00> : vector<16x32xf32>
    %16 = tpu.matmul %13, %15, %cst_7 {dimension_numbers = #tpu.dot_dimension_numbers<[1], [0], [0], [1], [0, 0, 1, 1], [], []>} : vector<16x112xf32>, vector<112x32xf32>, vector<16x32xf32> -> vector<16x32xf32>
    %c0_8 = arith.constant 0 : index
    %c0_9 = arith.constant 0 : index
    %c0_10 = arith.constant 0 : index
    %17 = vector.load %arg3[%c0_8, %c0_9, %c0_10] : memref<1x1x32xf32, #tpu.memory_space<vmem>>, vector<1x1x32xf32>
    %18 = vector.shape_cast %17 : vector<1x1x32xf32> to vector<1x32xf32>
    %19 = vector.broadcast %18 : vector<1x32xf32> to vector<16x32xf32>
    %20 = arith.addf %16, %19 : vector<16x32xf32>
    %c0_11 = arith.constant 0 : index
    %c0_12 = arith.constant 0 : index
    %c0_13 = arith.constant 0 : index
    %21 = vector.load %arg4[%c0_11, %c0_12, %c0_13] : memref<1x1x32xf32, #tpu.memory_space<vmem>>, vector<1x1x32xf32>
    %22 = vector.shape_cast %21 : vector<1x1x32xf32> to vector<1x32xf32>
    %c0_14 = arith.constant 0 : index
    %c0_15 = arith.constant 0 : index
    %c0_16 = arith.constant 0 : index
    %23 = vector.load %arg5[%c0_14, %c0_15, %c0_16] : memref<1x1x32xf32, #tpu.memory_space<vmem>>, vector<1x1x32xf32>
    %24 = vector.shape_cast %23 : vector<1x1x32xf32> to vector<1x32xf32>
    %cst_17 = arith.constant dense<0.000000e+00> : vector<32xf32>
    %25 = vector.multi_reduction <add>, %20, %cst_17 [0] : vector<16x32xf32> to vector<32xf32>
    %26 = vector.shape_cast %25 : vector<32xf32> to vector<1x32xf32>
    %cst_18 = arith.constant 1.600000e+01 : f32
    %27 = vector.broadcast %cst_18 : f32 to vector<1x32xf32>
    %28 = arith.divf %26, %27 : vector<1x32xf32>
    %29 = vector.broadcast %28 : vector<1x32xf32> to vector<16x32xf32>
    %30 = arith.subf %20, %29 : vector<16x32xf32>
    %31 = arith.mulf %30, %30 : vector<16x32xf32>
    %cst_19 = arith.constant dense<0.000000e+00> : vector<32xf32>
    %32 = vector.multi_reduction <add>, %31, %cst_19 [0] : vector<16x32xf32> to vector<32xf32>
    %33 = vector.shape_cast %32 : vector<32xf32> to vector<1x32xf32>
    %cst_20 = arith.constant 1.600000e+01 : f32
    %34 = vector.broadcast %cst_20 : f32 to vector<1x32xf32>
    %35 = arith.divf %33, %34 : vector<1x32xf32>
    %36 = vector.broadcast %28 : vector<1x32xf32> to vector<16x32xf32>
    %37 = arith.subf %20, %36 : vector<16x32xf32>
    %cst_21 = arith.constant 9.99999974E-6 : f32
    %38 = vector.broadcast %cst_21 : f32 to vector<1x32xf32>
    %39 = arith.addf %35, %38 : vector<1x32xf32>
    %40 = math.rsqrt %39 : vector<1x32xf32>
    %41 = vector.broadcast %40 : vector<1x32xf32> to vector<16x32xf32>
    %42 = arith.mulf %37, %41 : vector<16x32xf32>
    %43 = vector.broadcast %22 : vector<1x32xf32> to vector<16x32xf32>
    %44 = arith.mulf %42, %43 : vector<16x32xf32>
    %45 = vector.broadcast %24 : vector<1x32xf32> to vector<16x32xf32>
    %46 = arith.addf %44, %45 : vector<16x32xf32>
    %cst_22 = arith.constant 0.000000e+00 : f32
    %47 = vector.broadcast %cst_22 : f32 to vector<16x32xf32>
    %48 = arith.cmpf ogt, %46, %47 : vector<16x32xf32>
    %cst_23 = arith.constant 2.000000e-01 : f32
    %49 = vector.broadcast %cst_23 : f32 to vector<16x32xf32>
    %50 = arith.mulf %49, %46 : vector<16x32xf32>
    %51 = arith.select %48, %46, %50 : vector<16x32xi1>, vector<16x32xf32>
    %52 = vector.shape_cast %51 : vector<16x32xf32> to vector<2x8x32xf32>
    %cst_24 = arith.constant 0.000000e+00 : f32
    %53 = vector.broadcast %cst_24 : f32 to vector<2x3x32xf32>
    %cst_25 = arith.constant 0.000000e+00 : f32
    %54 = vector.broadcast %cst_25 : f32 to vector<2x3x32xf32>
    %55 = tpu.concatenate %53, %52, %54 in 1 : vector<2x3x32xf32>, vector<2x8x32xf32>, vector<2x3x32xf32> -> vector<2x14x32xf32>
    %56 = vector.extract_strided_slice %55 {offsets = [0, 0, 0], sizes = [2, 8, 32], strides = [1, 1, 1]} : vector<2x14x32xf32> to vector<2x8x32xf32>
    %57 = vector.extract_strided_slice %55 {offsets = [0, 1, 0], sizes = [2, 8, 32], strides = [1, 1, 1]} : vector<2x14x32xf32> to vector<2x8x32xf32>
    %58 = vector.extract_strided_slice %55 {offsets = [0, 2, 0], sizes = [2, 8, 32], strides = [1, 1, 1]} : vector<2x14x32xf32> to vector<2x8x32xf32>
    %59 = vector.extract_strided_slice %55 {offsets = [0, 3, 0], sizes = [2, 8, 32], strides = [1, 1, 1]} : vector<2x14x32xf32> to vector<2x8x32xf32>
    %60 = vector.extract_strided_slice %55 {offsets = [0, 4, 0], sizes = [2, 8, 32], strides = [1, 1, 1]} : vector<2x14x32xf32> to vector<2x8x32xf32>
    %61 = vector.extract_strided_slice %55 {offsets = [0, 5, 0], sizes = [2, 8, 32], strides = [1, 1, 1]} : vector<2x14x32xf32> to vector<2x8x32xf32>
    %62 = vector.extract_strided_slice %55 {offsets = [0, 6, 0], sizes = [2, 8, 32], strides = [1, 1, 1]} : vector<2x14x32xf32> to vector<2x8x32xf32>
    %63 = tpu.concatenate %56, %57, %58, %59, %60, %61, %62 in 2 : vector<2x8x32xf32>, vector<2x8x32xf32>, vector<2x8x32xf32>, vector<2x8x32xf32>, vector<2x8x32xf32>, vector<2x8x32xf32>, vector<2x8x32xf32> -> vector<2x8x224xf32>
    %64 = vector.shape_cast %63 : vector<2x8x224xf32> to vector<16x224xf32>
    %c0_26 = arith.constant 0 : index
    %c0_27 = arith.constant 0 : index
    %c0_28 = arith.constant 0 : index
    %65 = vector.load %arg6[%c0_26, %c0_27, %c0_28] : memref<1x224x32xf32, #tpu.memory_space<vmem>>, vector<1x224x32xf32>
    %66 = vector.shape_cast %65 : vector<1x224x32xf32> to vector<224x32xf32>
    %cst_29 = arith.constant dense<0.000000e+00> : vector<16x32xf32>
    %67 = tpu.matmul %64, %66, %cst_29 {dimension_numbers = #tpu.dot_dimension_numbers<[1], [0], [0], [1], [0, 0, 1, 1], [], []>} : vector<16x224xf32>, vector<224x32xf32>, vector<16x32xf32> -> vector<16x32xf32>
    %c0_30 = arith.constant 0 : index
    %c0_31 = arith.constant 0 : index
    %c0_32 = arith.constant 0 : index
    %68 = vector.load %arg7[%c0_30, %c0_31, %c0_32] : memref<1x1x32xf32, #tpu.memory_space<vmem>>, vector<1x1x32xf32>
    %69 = vector.shape_cast %68 : vector<1x1x32xf32> to vector<1x32xf32>
    %70 = vector.broadcast %69 : vector<1x32xf32> to vector<16x32xf32>
    %71 = arith.addf %67, %70 : vector<16x32xf32>
    %c0_33 = arith.constant 0 : index
    %c0_34 = arith.constant 0 : index
    %c0_35 = arith.constant 0 : index
    %72 = vector.load %arg8[%c0_33, %c0_34, %c0_35] : memref<1x1x32xf32, #tpu.memory_space<vmem>>, vector<1x1x32xf32>
    %73 = vector.shape_cast %72 : vector<1x1x32xf32> to vector<1x32xf32>
    %c0_36 = arith.constant 0 : index
    %c0_37 = arith.constant 0 : index
    %c0_38 = arith.constant 0 : index
    %74 = vector.load %arg9[%c0_36, %c0_37, %c0_38] : memref<1x1x32xf32, #tpu.memory_space<vmem>>, vector<1x1x32xf32>
    %75 = vector.shape_cast %74 : vector<1x1x32xf32> to vector<1x32xf32>
    %cst_39 = arith.constant dense<0.000000e+00> : vector<32xf32>
    %76 = vector.multi_reduction <add>, %71, %cst_39 [0] : vector<16x32xf32> to vector<32xf32>
    %77 = vector.shape_cast %76 : vector<32xf32> to vector<1x32xf32>
    %cst_40 = arith.constant 1.600000e+01 : f32
    %78 = vector.broadcast %cst_40 : f32 to vector<1x32xf32>
    %79 = arith.divf %77, %78 : vector<1x32xf32>
    %80 = vector.broadcast %79 : vector<1x32xf32> to vector<16x32xf32>
    %81 = arith.subf %71, %80 : vector<16x32xf32>
    %82 = arith.mulf %81, %81 : vector<16x32xf32>
    %cst_41 = arith.constant dense<0.000000e+00> : vector<32xf32>
    %83 = vector.multi_reduction <add>, %82, %cst_41 [0] : vector<16x32xf32> to vector<32xf32>
    %84 = vector.shape_cast %83 : vector<32xf32> to vector<1x32xf32>
    %cst_42 = arith.constant 1.600000e+01 : f32
    %85 = vector.broadcast %cst_42 : f32 to vector<1x32xf32>
    %86 = arith.divf %84, %85 : vector<1x32xf32>
    %87 = vector.broadcast %79 : vector<1x32xf32> to vector<16x32xf32>
    %88 = arith.subf %71, %87 : vector<16x32xf32>
    %cst_43 = arith.constant 9.99999974E-6 : f32
    %89 = vector.broadcast %cst_43 : f32 to vector<1x32xf32>
    %90 = arith.addf %86, %89 : vector<1x32xf32>
    %91 = math.rsqrt %90 : vector<1x32xf32>
    %92 = vector.broadcast %91 : vector<1x32xf32> to vector<16x32xf32>
    %93 = arith.mulf %88, %92 : vector<16x32xf32>
    %94 = vector.broadcast %73 : vector<1x32xf32> to vector<16x32xf32>
    %95 = arith.mulf %93, %94 : vector<16x32xf32>
    %96 = vector.broadcast %75 : vector<1x32xf32> to vector<16x32xf32>
    %97 = arith.addf %95, %96 : vector<16x32xf32>
    %cst_44 = arith.constant 0.000000e+00 : f32
    %98 = vector.broadcast %cst_44 : f32 to vector<16x32xf32>
    %99 = arith.cmpf ogt, %97, %98 : vector<16x32xf32>
    %cst_45 = arith.constant 2.000000e-01 : f32
    %100 = vector.broadcast %cst_45 : f32 to vector<16x32xf32>
    %101 = arith.mulf %100, %97 : vector<16x32xf32>
    %102 = arith.select %99, %97, %101 : vector<16x32xi1>, vector<16x32xf32>
    %103 = vector.shape_cast %102 : vector<16x32xf32> to vector<2x8x32xf32>
    %cst_46 = arith.constant 0.000000e+00 : f32
    %104 = vector.broadcast %cst_46 : f32 to vector<2x1x32xf32>
    %cst_47 = arith.constant 0.000000e+00 : f32
    %105 = vector.broadcast %cst_47 : f32 to vector<2x2x32xf32>
    %106 = tpu.concatenate %104, %103, %105 in 1 : vector<2x1x32xf32>, vector<2x8x32xf32>, vector<2x2x32xf32> -> vector<2x11x32xf32>
    %107 = vector.extract_strided_slice %106 {offsets = [0, 0, 0], sizes = [2, 8, 32], strides = [1, 1, 1]} : vector<2x11x32xf32> to vector<2x8x32xf32>
    %108 = vector.extract_strided_slice %106 {offsets = [0, 1, 0], sizes = [2, 8, 32], strides = [1, 1, 1]} : vector<2x11x32xf32> to vector<2x8x32xf32>
    %109 = vector.extract_strided_slice %106 {offsets = [0, 2, 0], sizes = [2, 8, 32], strides = [1, 1, 1]} : vector<2x11x32xf32> to vector<2x8x32xf32>
    %110 = vector.extract_strided_slice %106 {offsets = [0, 3, 0], sizes = [2, 8, 32], strides = [1, 1, 1]} : vector<2x11x32xf32> to vector<2x8x32xf32>
    %111 = tpu.concatenate %107, %108, %109, %110 in 2 : vector<2x8x32xf32>, vector<2x8x32xf32>, vector<2x8x32xf32>, vector<2x8x32xf32> -> vector<2x8x128xf32>
    %112 = vector.shape_cast %111 : vector<2x8x128xf32> to vector<16x128xf32>
    %c0_48 = arith.constant 0 : index
    %c0_49 = arith.constant 0 : index
    %c0_50 = arith.constant 0 : index
    %113 = vector.load %arg10[%c0_48, %c0_49, %c0_50] : memref<1x128x32xf32, #tpu.memory_space<vmem>>, vector<1x128x32xf32>
    %114 = vector.shape_cast %113 : vector<1x128x32xf32> to vector<128x32xf32>
    %cst_51 = arith.constant dense<0.000000e+00> : vector<16x32xf32>
    %115 = tpu.matmul %112, %114, %cst_51 {dimension_numbers = #tpu.dot_dimension_numbers<[1], [0], [0], [1], [0, 0, 1, 1], [], []>} : vector<16x128xf32>, vector<128x32xf32>, vector<16x32xf32> -> vector<16x32xf32>
    %c0_52 = arith.constant 0 : index
    %c0_53 = arith.constant 0 : index
    %c0_54 = arith.constant 0 : index
    %116 = vector.load %arg11[%c0_52, %c0_53, %c0_54] : memref<1x1x32xf32, #tpu.memory_space<vmem>>, vector<1x1x32xf32>
    %117 = vector.shape_cast %116 : vector<1x1x32xf32> to vector<1x32xf32>
    %118 = vector.broadcast %117 : vector<1x32xf32> to vector<16x32xf32>
    %119 = arith.addf %115, %118 : vector<16x32xf32>
    %120 = vector.extract_strided_slice %119 {offsets = [0, 0], sizes = [16, 16], strides = [1, 1]} : vector<16x32xf32> to vector<16x16xf32>
    %121 = vector.extract_strided_slice %119 {offsets = [0, 16], sizes = [16, 16], strides = [1, 1]} : vector<16x32xf32> to vector<16x16xf32>
    %cst_55 = arith.constant dense<0.000000e+00> : vector<16xf32>
    %122 = vector.multi_reduction <add>, %120, %cst_55 [0] : vector<16x16xf32> to vector<16xf32>
    %123 = vector.shape_cast %122 : vector<16xf32> to vector<1x16xf32>
    %cst_56 = arith.constant 1.600000e+01 : f32
    %124 = vector.broadcast %cst_56 : f32 to vector<1x16xf32>
    %125 = arith.divf %123, %124 : vector<1x16xf32>
    %cst_57 = arith.constant dense<0.000000e+00> : vector<16xf32>
    %126 = vector.multi_reduction <add>, %121, %cst_57 [0] : vector<16x16xf32> to vector<16xf32>
    %127 = vector.shape_cast %126 : vector<16xf32> to vector<1x16xf32>
    %cst_58 = arith.constant 1.600000e+01 : f32
    %128 = vector.broadcast %cst_58 : f32 to vector<1x16xf32>
    %129 = arith.divf %127, %128 : vector<1x16xf32>
    %130 = arith.addf %125, %129 : vector<1x16xf32>
    %cst_59 = arith.constant 5.000000e-01 : f32
    %131 = vector.broadcast %cst_59 : f32 to vector<1x16xf32>
    %132 = arith.mulf %131, %130 : vector<1x16xf32>
    %133 = vector.broadcast %132 : vector<1x16xf32> to vector<16x16xf32>
    %134 = arith.subf %120, %133 : vector<16x16xf32>
    %135 = arith.mulf %134, %134 : vector<16x16xf32>
    %cst_60 = arith.constant dense<0.000000e+00> : vector<16xf32>
    %136 = vector.multi_reduction <add>, %135, %cst_60 [0] : vector<16x16xf32> to vector<16xf32>
    %137 = vector.shape_cast %136 : vector<16xf32> to vector<1x16xf32>
    %cst_61 = arith.constant 1.600000e+01 : f32
    %138 = vector.broadcast %cst_61 : f32 to vector<1x16xf32>
    %139 = arith.divf %137, %138 : vector<1x16xf32>
    %140 = vector.broadcast %132 : vector<1x16xf32> to vector<16x16xf32>
    %141 = arith.subf %121, %140 : vector<16x16xf32>
    %142 = arith.mulf %141, %141 : vector<16x16xf32>
    %cst_62 = arith.constant dense<0.000000e+00> : vector<16xf32>
    %143 = vector.multi_reduction <add>, %142, %cst_62 [0] : vector<16x16xf32> to vector<16xf32>
    %144 = vector.shape_cast %143 : vector<16xf32> to vector<1x16xf32>
    %cst_63 = arith.constant 1.600000e+01 : f32
    %145 = vector.broadcast %cst_63 : f32 to vector<1x16xf32>
    %146 = arith.divf %144, %145 : vector<1x16xf32>
    %147 = arith.addf %139, %146 : vector<1x16xf32>
    %cst_64 = arith.constant 5.000000e-01 : f32
    %148 = vector.broadcast %cst_64 : f32 to vector<1x16xf32>
    %149 = arith.mulf %148, %147 : vector<1x16xf32>
    %cst_65 = arith.constant 9.99999974E-6 : f32
    %150 = vector.broadcast %cst_65 : f32 to vector<1x16xf32>
    %151 = arith.addf %149, %150 : vector<1x16xf32>
    %152 = math.rsqrt %151 : vector<1x16xf32>
    %c0_66 = arith.constant 0 : index
    %c0_67 = arith.constant 0 : index
    %c0_68 = arith.constant 0 : index
    %153 = vector.load %arg12[%c0_66, %c0_67, %c0_68] : memref<1x1x16xf32, #tpu.memory_space<vmem>>, vector<1x1x16xf32>
    %154 = vector.shape_cast %153 : vector<1x1x16xf32> to vector<1x16xf32>
    %155 = arith.mulf %152, %154 : vector<1x16xf32>
    %c0_69 = arith.constant 0 : index
    %c0_70 = arith.constant 0 : index
    %c0_71 = arith.constant 0 : index
    %156 = vector.load %arg13[%c0_69, %c0_70, %c0_71] : memref<1x1x16xf32, #tpu.memory_space<vmem>>, vector<1x1x16xf32>
    %157 = vector.shape_cast %156 : vector<1x1x16xf32> to vector<1x16xf32>
    %158 = arith.mulf %132, %155 : vector<1x16xf32>
    %159 = arith.subf %157, %158 : vector<1x16xf32>
    %160 = tpu.concatenate %155, %155 in 1 : vector<1x16xf32>, vector<1x16xf32> -> vector<1x32xf32>
    %161 = tpu.concatenate %159, %159 in 1 : vector<1x16xf32>, vector<1x16xf32> -> vector<1x32xf32>
    %162 = vector.broadcast %160 : vector<1x32xf32> to vector<16x32xf32>
    %163 = arith.mulf %119, %162 : vector<16x32xf32>
    %164 = vector.broadcast %161 : vector<1x32xf32> to vector<16x32xf32>
    %165 = arith.addf %163, %164 : vector<16x32xf32>
    %cst_72 = arith.constant 0.000000e+00 : f32
    %166 = vector.broadcast %cst_72 : f32 to vector<16x32xf32>
    %167 = arith.cmpf ogt, %165, %166 : vector<16x32xf32>
    %cst_73 = arith.constant 2.000000e-01 : f32
    %168 = vector.broadcast %cst_73 : f32 to vector<16x32xf32>
    %169 = arith.mulf %168, %165 : vector<16x32xf32>
    %170 = arith.select %167, %165, %169 : vector<16x32xi1>, vector<16x32xf32>
    %171 = vector.shape_cast %170 : vector<16x32xf32> to vector<2x8x32xf32>
    %c0_74 = arith.constant 0 : index
    %c0_75 = arith.constant 0 : index
    %c0_76 = arith.constant 0 : index
    %c0_77 = arith.constant 0 : index
    %172 = vector.load %arg14[%c0_74, %c0_75, %c0_76, %c0_77] : memref<1x2x8x32xf32, #tpu.memory_space<vmem>>, vector<1x2x8x32xf32>
    %173 = vector.shape_cast %172 : vector<1x2x8x32xf32> to vector<2x8x32xf32>
    %174 = vector.shape_cast %171 : vector<2x8x32xf32> to vector<1x2x8x32xf32>
    tpu.vector_store %arg14[%c0_74, %c0_75, %c0_76, %c0_77], %174 {strides = array<i32>} : memref<1x2x8x32xf32, #tpu.memory_space<vmem>>, vector<1x2x8x32xf32>,
    return
  }
  func.func @transform_0(%arg0: i32) -> (i32, i32, i32, i32) {
    %c0_i32 = arith.constant 0 : i32
    %c0_i32_0 = arith.constant 0 : i32
    %c0_i32_1 = arith.constant 0 : i32
    %c0_i32_2 = arith.constant 0 : i32
    return %arg0, %c0_i32, %c0_i32_0, %c0_i32_1 : i32, i32, i32, i32
  }
  func.func @transform_1(%arg0: i32) -> (i32, i32, i32) {
    %c0_i32 = arith.constant 0 : i32
    %c0_i32_0 = arith.constant 0 : i32
    %c0_i32_1 = arith.constant 0 : i32
    return %arg0, %c0_i32, %c0_i32_0 : i32, i32, i32
  }
  func.func @transform_2(%arg0: i32) -> (i32, i32, i32) {
    %c0_i32 = arith.constant 0 : i32
    %c0_i32_0 = arith.constant 0 : i32
    %c0_i32_1 = arith.constant 0 : i32
    return %arg0, %c0_i32, %c0_i32_0 : i32, i32, i32
  }
  func.func @transform_3(%arg0: i32) -> (i32, i32, i32) {
    %c0_i32 = arith.constant 0 : i32
    %c0_i32_0 = arith.constant 0 : i32
    %c0_i32_1 = arith.constant 0 : i32
    return %arg0, %c0_i32, %c0_i32_0 : i32, i32, i32
  }
  func.func @transform_4(%arg0: i32) -> (i32, i32, i32) {
    %c0_i32 = arith.constant 0 : i32
    %c0_i32_0 = arith.constant 0 : i32
    %c0_i32_1 = arith.constant 0 : i32
    return %arg0, %c0_i32, %c0_i32_0 : i32, i32, i32
  }
  func.func @transform_5(%arg0: i32) -> (i32, i32, i32) {
    %c0_i32 = arith.constant 0 : i32
    %c0_i32_0 = arith.constant 0 : i32
    %c0_i32_1 = arith.constant 0 : i32
    return %arg0, %c0_i32, %c0_i32_0 : i32, i32, i32
  }
  func.func @transform_6(%arg0: i32) -> (i32, i32, i32) {
    %c0_i32 = arith.constant 0 : i32
    %c0_i32_0 = arith.constant 0 : i32
    %c0_i32_1 = arith.constant 0 : i32
    return %arg0, %c0_i32, %c0_i32_0 : i32, i32, i32
  }
  func.func @transform_7(%arg0: i32) -> (i32, i32, i32) {
    %c0_i32 = arith.constant 0 : i32
    %c0_i32_0 = arith.constant 0 : i32
    %c0_i32_1 = arith.constant 0 : i32
    return %arg0, %c0_i32, %c0_i32_0 : i32, i32, i32
  }
  func.func @transform_8(%arg0: i32) -> (i32, i32, i32) {
    %c0_i32 = arith.constant 0 : i32
    %c0_i32_0 = arith.constant 0 : i32
    %c0_i32_1 = arith.constant 0 : i32
    return %arg0, %c0_i32, %c0_i32_0 : i32, i32, i32
  }
  func.func @transform_9(%arg0: i32) -> (i32, i32, i32) {
    %c0_i32 = arith.constant 0 : i32
    %c0_i32_0 = arith.constant 0 : i32
    %c0_i32_1 = arith.constant 0 : i32
    return %arg0, %c0_i32, %c0_i32_0 : i32, i32, i32
  }
  func.func @transform_10(%arg0: i32) -> (i32, i32, i32) {
    %c0_i32 = arith.constant 0 : i32
    %c0_i32_0 = arith.constant 0 : i32
    %c0_i32_1 = arith.constant 0 : i32
    return %arg0, %c0_i32, %c0_i32_0 : i32, i32, i32
  }
  func.func @transform_11(%arg0: i32) -> (i32, i32, i32) {
    %c0_i32 = arith.constant 0 : i32
    %c0_i32_0 = arith.constant 0 : i32
    %c0_i32_1 = arith.constant 0 : i32
    return %arg0, %c0_i32, %c0_i32_0 : i32, i32, i32
  }
  func.func @transform_12(%arg0: i32) -> (i32, i32, i32) {
    %c0_i32 = arith.constant 0 : i32
    %c0_i32_0 = arith.constant 0 : i32
    %c0_i32_1 = arith.constant 0 : i32
    return %arg0, %c0_i32, %c0_i32_0 : i32, i32, i32
  }
  func.func @transform_13(%arg0: i32) -> (i32, i32, i32, i32) {
    %c0_i32 = arith.constant 0 : i32
    %c0_i32_0 = arith.constant 0 : i32
    %c0_i32_1 = arith.constant 0 : i32
    %c0_i32_2 = arith.constant 0 : i32
    return %arg0, %c0_i32, %c0_i32_0, %c0_i32_1 : i32, i32, i32, i32
  }
}

</mosaic_0001>

<llo_original>
// kernel: upsample_pallas.1
$region0: #{upsample_pallas.1}
  #allocation0 [shape = 'u32[]', space=smem, size = 0x4, offset = 0x4, fixed_abs, tag = 'smem constant byte address 0x4 - core index']
  #allocation1 [shape = 'u32[144,128]{1,0:T(1,128)}', space=vmem, size = 0x12000, scoped, tag = 'internal scratch']
  %s0 = inlined_call_operand.vmem [shape: f32[1,2,8,16], index: 0, kind: input, shape index: {}]
  %s1 = inlined_call_operand.vmem [shape: f32[1,112,32], index: 1, kind: input, shape index: {}]
  %s2 = inlined_call_operand.vmem [shape: f32[1,1,32], index: 2, kind: input, shape index: {}]
  %s3 = inlined_call_operand.vmem [shape: f32[1,1,32], index: 3, kind: input, shape index: {}]
  %s4 = inlined_call_operand.vmem [shape: f32[1,1,32], index: 4, kind: input, shape index: {}]
  %s5 = inlined_call_operand.vmem [shape: f32[1,224,32], index: 5, kind: input, shape index: {}]
  %s6 = inlined_call_operand.vmem [shape: f32[1,1,32], index: 6, kind: input, shape index: {}]
  %s7 = inlined_call_operand.vmem [shape: f32[1,1,32], index: 7, kind: input, shape index: {}]
  %s8 = inlined_call_operand.vmem [shape: f32[1,1,32], index: 8, kind: input, shape index: {}]
  %s9 = inlined_call_operand.vmem [shape: f32[1,128,32], index: 9, kind: input, shape index: {}]
  %s10 = inlined_call_operand.vmem [shape: f32[1,1,32], index: 10, kind: input, shape index: {}]
  %s11 = inlined_call_operand.vmem [shape: f32[1,1,16], index: 11, kind: input, shape index: {}]
  %s12 = inlined_call_operand.vmem [shape: f32[1,1,16], index: 12, kind: input, shape index: {}]
  %s13 = inlined_call_operand.vmem [shape: f32[1,2,8,32], index: 13, kind: output, shape index: {}]
  %s14 = sld [smem:[#allocation0]]
  $region62: #{upsample_pallas.1} parent=0
    _
  %s16 = ssub.s32 1, %s14
  %s17 = scalar_select 0, %s16, %s14
  // Predicated region
  $region2: #{upsample_pallas.1} parent=0 // pred_check
    _
  $region3: #{upsample_pallas.1} parent=0 // pred_check_branch
    %19 = sbr.rel (0) target = $region5
  $region4: #{upsample_pallas.1} parent=0 // pred_region
    _
  $region5: #{upsample_pallas.1} parent=0 // pred_fallthru
    _
  // Predicated region
  $region6: #{upsample_pallas.1} parent=0 // pred_check
    _
  $region7: #{upsample_pallas.1} parent=0 // pred_check_branch
    %21 = sbr.rel (0) target = $region9
  $region8: #{upsample_pallas.1} parent=0 // pred_region
    _
  $region9: #{upsample_pallas.1} parent=0 // pred_fallthru
    _
  // Predicated region
  $region10: #{upsample_pallas.1} parent=0 // pred_check
    _
  $region11: #{upsample_pallas.1} parent=0 // pred_check_branch
    %23 = sbr.rel (0) target = $region13
  $region12: #{upsample_pallas.1} parent=0 // pred_region
    _
  $region13: #{upsample_pallas.1} parent=0 // pred_fallthru
    _
  // Predicated region
  $region14: #{upsample_pallas.1} parent=0 // pred_check
    _
  $region15: #{upsample_pallas.1} parent=0 // pred_check_branch
    %25 = sbr.rel (0) target = $region17
  $region16: #{upsample_pallas.1} parent=0 // pred_region
    _
  $region17: #{upsample_pallas.1} parent=0 // pred_fallthru
    _
  // Predicated region
  $region18: #{upsample_pallas.1} parent=0 // pred_check
    _
  $region19: #{upsample_pallas.1} parent=0 // pred_check_branch
    %27 = sbr.rel (0) target = $region21
  $region20: #{upsample_pallas.1} parent=0 // pred_region
    _
  $region21: #{upsample_pallas.1} parent=0 // pred_fallthru
    _
  // Predicated region
  $region22: #{upsample_pallas.1} parent=0 // pred_check
    _
  $region23: #{upsample_pallas.1} parent=0 // pred_check_branch
    %29 = sbr.rel (0) target = $region25
  $region24: #{upsample_pallas.1} parent=0 // pred_region
    _
  $region25: #{upsample_pallas.1} parent=0 // pred_fallthru
    _
  // Predicated region
  $region26: #{upsample_pallas.1} parent=0 // pred_check
    _
  $region27: #{upsample_pallas.1} parent=0 // pred_check_branch
    %31 = sbr.rel (0) target = $region29
  $region28: #{upsample_pallas.1} parent=0 // pred_region
    _
  $region29: #{upsample_pallas.1} parent=0 // pred_fallthru
    _
  // Predicated region
  $region30: #{upsample_pallas.1} parent=0 // pred_check
    _
  $region31: #{upsample_pallas.1} parent=0 // pred_check_branch
    %33 = sbr.rel (0) target = $region33
  $region32: #{upsample_pallas.1} parent=0 // pred_region
    _
  $region33: #{upsample_pallas.1} parent=0 // pred_fallthru
    _
  // Predicated region
  $region34: #{upsample_pallas.1} parent=0 // pred_check
    _
  $region35: #{upsample_pallas.1} parent=0 // pred_check_branch
    %35 = sbr.rel (0) target = $region37
  $region36: #{upsample_pallas.1} parent=0 // pred_region
    _
  $region37: #{upsample_pallas.1} parent=0 // pred_fallthru
    _
  // Predicated region
  $region38: #{upsample_pallas.1} parent=0 // pred_check
    _
  $region39: #{upsample_pallas.1} parent=0 // pred_check_branch
    %37 = sbr.rel (0) target = $region41
  $region40: #{upsample_pallas.1} parent=0 // pred_region
    _
  $region41: #{upsample_pallas.1} parent=0 // pred_fallthru
    _
  // Predicated region
  $region42: #{upsample_pallas.1} parent=0 // pred_check
    _
  $region43: #{upsample_pallas.1} parent=0 // pred_check_branch
    %39 = sbr.rel (0) target = $region45
  $region44: #{upsample_pallas.1} parent=0 // pred_region
    _
  $region45: #{upsample_pallas.1} parent=0 // pred_fallthru
    _
  // Predicated region
  $region46: #{upsample_pallas.1} parent=0 // pred_check
    _
  $region47: #{upsample_pallas.1} parent=0 // pred_check_branch
    %41 = sbr.rel (0) target = $region49
  $region48: #{upsample_pallas.1} parent=0 // pred_region
    _
  $region49: #{upsample_pallas.1} parent=0 // pred_fallthru
    _
  // Predicated region
  $region50: #{upsample_pallas.1} parent=0 // pred_check
    _
  $region51: #{upsample_pallas.1} parent=0 // pred_check_branch
    %43 = sbr.rel (0) target = $region53
  $region52: #{upsample_pallas.1} parent=0 // pred_region
    _
  $region53: #{upsample_pallas.1} parent=0 // pred_fallthru
    _
  %v44 = vld [vmem:[%s0] sm:$0xff]
  %v45 = vld [vmem:[%s0 + $0x8] sm:$0xff]
  %v48 = vrot.slane %v44, 5
  %v49 = vrot.slane %v45, 5
  %vm52 = vcmask 1042432
  %v53 = vsel %vm52, 0.0, %v48
  %v54 = vsel %vm52, 0.0, %v49
  %v55 = vsel %vm52, %v48, 0.0
  %v56 = vsel %vm52, %v49, 0.0
  %vm61 = vcmask 1046528
  %v62 = vrot.slane %v53, 1
  %v63 = vrot.slane %v55, 1
  %v64 = vsel %vm61, %v62, %v63
  %v65 = vrot.slane %v54, 1
  %v66 = vrot.slane %v56, 1
  %v67 = vsel %vm61, %v65, %v66
  %68 = vrot.lane.b32.xlu0 %v64, 16
  %v69 = vpop.permute.xlu0 %68
  %70 = vrot.lane.b32.xlu0 %v67, 16
  %v71 = vpop.permute.xlu0 %70
  %vm74 = vcmask 1045504
  %v75 = vrot.slane %v53, 2
  %v76 = vrot.slane %v55, 2
  %v77 = vsel %vm74, %v75, %v76
  %v78 = vrot.slane %v54, 2
  %v79 = vrot.slane %v56, 2
  %v80 = vsel %vm74, %v78, %v79
  %81 = vrot.lane.b32.xlu0 %v77, 32
  %v82 = vpop.permute.xlu0 %81
  %83 = vrot.lane.b32.xlu0 %v80, 32
  %v84 = vpop.permute.xlu0 %83
  %vm87 = vcmask 1044480
  %v88 = vrot.slane %v53, 3
  %v89 = vrot.slane %v55, 3
  %v90 = vsel %vm87, %v88, %v89
  %v91 = vrot.slane %v54, 3
  %v92 = vrot.slane %v56, 3
  %v93 = vsel %vm87, %v91, %v92
  %94 = vrot.lane.b32.xlu0 %v90, 48
  %v95 = vpop.permute.xlu0 %94
  %96 = vrot.lane.b32.xlu0 %v93, 48
  %v97 = vpop.permute.xlu0 %96
  %vm100 = vcmask 1043456
  %v101 = vrot.slane %v53, 4
  %v102 = vrot.slane %v55, 4
  %v103 = vsel %vm100, %v101, %v102
  %v104 = vrot.slane %v54, 4
  %v105 = vrot.slane %v56, 4
  %v106 = vsel %vm100, %v104, %v105
  %107 = vrot.lane.b32.xlu0 %v103, 64
  %v108 = vpop.permute.xlu0 %107
  %109 = vrot.lane.b32.xlu0 %v106, 64
  %v110 = vpop.permute.xlu0 %109
  %v113 = vrot.slane %v53, 5
  %v114 = vrot.slane %v55, 5
  %v115 = vsel %vm52, %v113, %v114
  %v116 = vrot.slane %v54, 5
  %v117 = vrot.slane %v56, 5
  %v118 = vsel %vm52, %v116, %v117
  %119 = vrot.lane.b32.xlu0 %v115, 80
  %v120 = vpop.permute.xlu0 %119
  %121 = vrot.lane.b32.xlu0 %v118, 80
  %v122 = vpop.permute.xlu0 %121
  %vm125 = vcmask 1041408
  %v126 = vrot.slane %v53, 6
  %v127 = vrot.slane %v55, 6
  %v128 = vsel %vm125, %v126, %v127
  %v129 = vrot.slane %v54, 6
  %v130 = vrot.slane %v56, 6
  %v131 = vsel %vm125, %v129, %v130
  %132 = vrot.lane.b32.xlu0 %v128, 96
  %v133 = vpop.permute.xlu0 %132
  %134 = vrot.lane.b32.xlu0 %v131, 96
  %v135 = vpop.permute.xlu0 %134
  %vm138 = vcmask 130048
  %v139 = vsel %vm138, %v53, %v69
  %v140 = vsel %vm138, %v54, %v71
  %vm141 = vcmask 261120
  %v142 = vsel %vm141, %v139, %v82
  %v143 = vsel %vm141, %v140, %v84
  %vm144 = vcmask 392192
  %v145 = vsel %vm144, %v142, %v95
  %v146 = vsel %vm144, %v143, %v97
  %vm147 = vcmask 523264
  %v148 = vsel %vm147, %v145, %v108
  %v149 = vsel %vm147, %v146, %v110
  %vm150 = vcmask 654336
  %v151 = vsel %vm150, %v148, %v120
  %v152 = vsel %vm150, %v149, %v122
  %vm153 = vcmask 785408
  %v154 = vsel %vm153, %v151, %v133
  %v155 = vsel %vm153, %v152, %v135
  %v156 = vld [vmem:[%s1] sm:$0xff]
  %v157 = vld [vmem:[%s1 + $0x8] sm:$0xff]
  %v158 = vld [vmem:[%s1 + $0x10] sm:$0xff]
  %v159 = vld [vmem:[%s1 + $0x18] sm:$0xff]
  %v160 = vld [vmem:[%s1 + $0x20] sm:$0xff]
  %v161 = vld [vmem:[%s1 + $0x28] sm:$0xff]
  %v162 = vld [vmem:[%s1 + $0x30] sm:$0xff]
  %v163 = vld [vmem:[%s1 + $0x38] sm:$0xff]
  %v164 = vld [vmem:[%s1 + $0x40] sm:$0xff]
  %v165 = vld [vmem:[%s1 + $0x48] sm:$0xff]
  %v166 = vld [vmem:[%s1 + $0x50] sm:$0xff]
  %v167 = vld [vmem:[%s1 + $0x58] sm:$0xff]
  %v168 = vld [vmem:[%s1 + $0x60] sm:$0xff]
  %v169 = vld [vmem:[%s1 + $0x68] sm:$0xff]
  %v170 = vld [vmem:[%s2] sm:$0x1]
  %v172 = vlaneseq
  %v173 = vshrl.u32 %v172, 7
  %v174 = vsub.s32 0, %v173
  %v175 = vrot.slane %v170, %v174
  %vm177 = vcmask 916480
  %v179 = vsel %vm177, %v154, 0
  %v182 = vsel %vm177, %v155, 0
  %184 = vmatprep.subr.mxu0 0.0
  %185 = vmatpush1.msra.mxu0 0.0
  %186 = vmatprep.subr.mxu0 0.0
  %187 = vmatpush1.msra.mxu0 0.0
  %188 = vmatprep.subr.mxu0 0.0
  %189 = vmatpush1.msra.mxu0 %v169
  %190 = vmatprep.subr.mxu0 0.0
  %191 = vmatpush1.msra.mxu0 %v168
  %192 = vmatprep.subr.mxu0 0.0
  %193 = vmatpush1.msra.mxu0 %v167
  %194 = vmatprep.subr.mxu0 0.0
  %195 = vmatpush1.msra.mxu0 %v166
  %196 = vmatprep.subr.mxu0 0.0
  %197 = vmatpush1.msra.mxu0 %v165
  %198 = vmatprep.subr.mxu0 0.0
  %199 = vmatpush1.msra.mxu0 %v164
  %200 = vmatprep.subr.mxu0 0.0
  %201 = vmatpush1.msra.mxu0 %v163
  %202 = vmatprep.subr.mxu0 0.0
  %203 = vmatpush1.msra.mxu0 %v162
  %204 = vmatprep.subr.mxu0 0.0
  %205 = vmatpush1.msra.mxu0 %v161
  %206 = vmatprep.subr.mxu0 0.0
  %207 = vmatpush1.msra.mxu0 %v160
  %208 = vmatprep.subr.mxu0 0.0
  %209 = vmatpush1.msra.mxu0 %v159
  %210 = vmatprep.subr.mxu0 0.0
  %211 = vmatpush1.msra.mxu0 %v158
  %212 = vmatprep.subr.mxu0 0.0
  %213 = vmatpush1.msra.mxu0 %v157
  %214 = vmatprep.subr.mxu0 0.0
  %215 = vmatpush1.msra.mxu0 %v156
  %216 = vmatprep.subr.mxu0 0.0
  %217 = vmatpush2.msra.mxu0 0.0
  %218 = vmatprep.subr.mxu0 0.0
  %219 = vmatpush2.msra.mxu0 0.0
  %220 = vmatprep.subr.mxu0 0.0
  %221 = vmatpush2.msra.mxu0 0.0
  %222 = vmatprep.subr.mxu0 0.0
  %223 = vmatpush2.msra.mxu0 0.0
  %224 = vmatprep.subr.mxu0 0.0
  %225 = vmatpush2.msra.mxu0 0.0
  %226 = vmatprep.subr.mxu0 0.0
  %227 = vmatpush2.msra.mxu0 0.0
  %228 = vmatprep.subr.mxu0 0.0
  %229 = vmatpush2.msra.mxu0 0.0
  %230 = vmatprep.subr.mxu0 0.0
  %231 = vmatpush2.msra.mxu0 0.0
  %232 = vmatprep.subr.mxu0 0.0
  %233 = vmatpush2.msra.mxu0 0.0
  %234 = vmatprep.subr.mxu0 0.0
  %235 = vmatpush2.msra.mxu0 0.0
  %236 = vmatprep.subr.mxu0 0.0
  %237 = vmatpush2.msra.mxu0 0.0
  %238 = vmatprep.subr.mxu0 0.0
  %239 = vmatpush2.msra.mxu0 0.0
  %240 = vmatprep.subr.mxu0 0.0
  %241 = vmatpush2.msra.mxu0 0.0
  %242 = vmatprep.subr.mxu0 0.0
  %243 = vmatpush2.msra.mxu0 0.0
  %244 = vmatprep.subr.mxu0 0.0
  %245 = vmatpush2.msra.mxu0 0.0
  %246 = vmatprep.subr.mxu0 0.0
  %247 = vmatpush2.msra.mxu0 0.0
  %248 = vmatprep.mubr.f32.mxu0 0.0
  %249 = vmatmul.mubr.f32.gmra.mxu0 %v179
  %v250 = vpop.f32.mrf.mxu0
  %v251 = vadd.f32 %v175, %v250
  %v252 = vpop.f32.mrf.mxu0
  %253 = vmatprep.mubr.f32.mxu0 0.0
  %254 = vmatmul.mubr.f32.gmra.mxu0 %v182
  %v255 = vpop.f32.mrf.mxu0
  %v256 = vadd.f32 %v175, %v255
  %v257 = vpop.f32.mrf.mxu0
  %258 = vdwg.mxu0
  %v259 = vld [vmem:[%s3] sm:$0x1]
  %v260 = vld [vmem:[%s4] sm:$0x1]
  %v261 = vsel %vm141, %v251, 0.0
  %v262 = vsel %vm141, %v256, 0.0
  %v263 = vadd.f32 %v261, %v262
  %v264 = vrot.slane %v263, 4
  %v265 = vadd.f32 %v263, %v264
  %v266 = vrot.slane %v265, 2
  %v267 = vadd.f32 %v265, %v266
  %v268 = vrot.slane %v267, 1
  %v269 = vadd.f32 %v267, %v268
  %v270 = vrcp.pop 16.0
  %v271 = vmul.f32 %v269, %v270
  %v272 = vsub.f32 %v251, %v271
  %v273 = vsub.f32 %v256, %v271
  %v274 = vmul.f32 %v272, %v272
  %v275 = vmul.f32 %v273, %v273
  %v276 = vsel %vm141, %v274, 0.0
  %v277 = vsel %vm141, %v275, 0.0
  %v278 = vadd.f32 %v276, %v277
  %v279 = vrot.slane %v278, 4
  %v280 = vadd.f32 %v278, %v279
  %v281 = vrot.slane %v280, 2
  %v282 = vadd.f32 %v280, %v281
  %v283 = vrot.slane %v282, 1
  %v284 = vadd.f32 %v282, %v283
  %v285 = vmul.f32 %v284, %v270
  %v286 = vadd.f32 %v285, 1e-05
  %v287 = vrsqrt.pop %v286
  %v288 = vmul.f32 %v272, %v287
  %v289 = vmul.f32 %v273, %v287
  %v291 = vlaneseq
  %v292 = vshrl.u32 %v291, 7
  %v293 = vsub.s32 0, %v292
  %v294 = vrot.slane %v259, %v293
  %v296 = vmul.f32 %v288, %v294
  %v297 = vmul.f32 %v289, %v294
  %v299 = vlaneseq
  %v300 = vshrl.u32 %v299, 7
  %v301 = vsub.s32 0, %v300
  %v302 = vrot.slane %v260, %v301
  %v304 = vadd.f32 %v296, %v302
  %v305 = vadd.f32 %v297, %v302
  %vm306 = vcmp.gt.f32.partialorder %v304, 0.0
  %vm307 = vcmp.gt.f32.partialorder %v305, 0.0
  %v308 = vmul.f32 %v304, 0.2
  %v309 = vmul.f32 %v305, 0.2
  %v310 = vsel %vm306, %v304, %v308
  %v311 = vsel %vm307, %v305, %v309
  %v314 = vrot.slane %v310, 5
  %v315 = vrot.slane %v311, 5
  %v318 = vsel %vm52, 0.0, %v314
  %v319 = vsel %vm52, 0.0, %v315
  %v320 = vsel %vm52, %v314, 0.0
  %v321 = vsel %vm52, %v315, 0.0
  %v326 = vrot.slane %v318, 1
  %v327 = vrot.slane %v320, 1
  %v328 = vsel %vm61, %v326, %v327
  %v329 = vrot.slane %v319, 1
  %v330 = vrot.slane %v321, 1
  %v331 = vsel %vm61, %v329, %v330
  %332 = vrot.lane.b32.xlu0 %v328, 32
  %v333 = vpop.permute.xlu0 %332
  %334 = vrot.lane.b32.xlu0 %v331, 32
  %v335 = vpop.permute.xlu0 %334
  %v338 = vrot.slane %v318, 2
  %v339 = vrot.slane %v320, 2
  %v340 = vsel %vm74, %v338, %v339
  %v341 = vrot.slane %v319, 2
  %v342 = vrot.slane %v321, 2
  %v343 = vsel %vm74, %v341, %v342
  %344 = vrot.lane.b32.xlu0 %v340, 64
  %v345 = vpop.permute.xlu0 %344
  %346 = vrot.lane.b32.xlu0 %v343, 64
  %v347 = vpop.permute.xlu0 %346
  %v350 = vrot.slane %v318, 3
  %v351 = vrot.slane %v320, 3
  %v352 = vsel %vm87, %v350, %v351
  %v353 = vrot.slane %v319, 3
  %v354 = vrot.slane %v321, 3
  %v355 = vsel %vm87, %v353, %v354
  %356 = vrot.lane.b32.xlu0 %v352, 96
  %v357 = vpop.permute.xlu0 %356
  %358 = vrot.lane.b32.xlu0 %v355, 96
  %v359 = vpop.permute.xlu0 %358
  %v362 = vrot.slane %v318, 4
  %v363 = vrot.slane %v320, 4
  %v364 = vsel %vm100, %v362, %v363
  %v365 = vrot.slane %v319, 4
  %v366 = vrot.slane %v321, 4
  %v367 = vsel %vm100, %v365, %v366
  %v370 = vrot.slane %v318, 5
  %v371 = vrot.slane %v320, 5
  %v372 = vsel %vm52, %v370, %v371
  %v373 = vrot.slane %v319, 5
  %v374 = vrot.slane %v321, 5
  %v375 = vsel %vm52, %v373, %v374
  %376 = vrot.lane.b32.xlu0 %v372, 32
  %v377 = vpop.permute.xlu0 %376
  %378 = vrot.lane.b32.xlu0 %v375, 32
  %v379 = vpop.permute.xlu0 %378
  %v382 = vrot.slane %v318, 6
  %v383 = vrot.slane %v320, 6
  %v384 = vsel %vm125, %v382, %v383
  %v385 = vrot.slane %v319, 6
  %v386 = vrot.slane %v321, 6
  %v387 = vsel %vm125, %v385, %v386
  %388 = vrot.lane.b32.xlu0 %v384, 64
  %v389 = vpop.permute.xlu0 %388
  %390 = vrot.lane.b32.xlu0 %v387, 64
  %v391 = vpop.permute.xlu0 %390
  %v394 = vsel %vm141, %v318, %v333
  %v395 = vsel %vm141, %v319, %v335
  %v396 = vsel %vm147, %v394, %v345
  %v397 = vsel %vm147, %v395, %v347
  %v398 = vsel %vm153, %v396, %v357
  %v399 = vsel %vm153, %v397, %v359
  %v400 = vsel %vm141, %v364, %v377
  %v401 = vsel %vm141, %v367, %v379
  %v402 = vsel %vm147, %v400, %v389
  %v403 = vsel %vm147, %v401, %v391
  %v404 = vld [vmem:[%s5] sm:$0xff]
  %v405 = vld [vmem:[%s5 + $0x8] sm:$0xff]
  %v406 = vld [vmem:[%s5 + $0x10] sm:$0xff]
  %v407 = vld [vmem:[%s5 + $0x18] sm:$0xff]
  %v408 = vld [vmem:[%s5 + $0x20] sm:$0xff]
  %v409 = vld [vmem:[%s5 + $0x28] sm:$0xff]
  %v410 = vld [vmem:[%s5 + $0x30] sm:$0xff]
  %v411 = vld [vmem:[%s5 + $0x38] sm:$0xff]
  %v412 = vld [vmem:[%s5 + $0x40] sm:$0xff]
  %v413 = vld [vmem:[%s5 + $0x48] sm:$0xff]
  %v414 = vld [vmem:[%s5 + $0x50] sm:$0xff]
  %v415 = vld [vmem:[%s5 + $0x58] sm:$0xff]
  %v416 = vld [vmem:[%s5 + $0x60] sm:$0xff]
  %v417 = vld [vmem:[%s5 + $0x68] sm:$0xff]
  %v418 = vld [vmem:[%s5 + $0x70] sm:$0xff]
  %v419 = vld [vmem:[%s5 + $0x78] sm:$0xff]
  %v420 = vld [vmem:[%s5 + $0x80] sm:$0xff]
  %v421 = vld [vmem:[%s5 + $0x88] sm:$0xff]
  %v422 = vld [vmem:[%s5 + $0x90] sm:$0xff]
  %v423 = vld [vmem:[%s5 + $0x98] sm:$0xff]
  %v424 = vld [vmem:[%s5 + $0xa0] sm:$0xff]
  %v425 = vld [vmem:[%s5 + $0xa8] sm:$0xff]
  %v426 = vld [vmem:[%s5 + $0xb0] sm:$0xff]
  %v427 = vld [vmem:[%s5 + $0xb8] sm:$0xff]
  %v428 = vld [vmem:[%s5 + $0xc0] sm:$0xff]
  %v429 = vld [vmem:[%s5 + $0xc8] sm:$0xff]
  %v430 = vld [vmem:[%s5 + $0xd0] sm:$0xff]
  %v431 = vld [vmem:[%s5 + $0xd8] sm:$0xff]
  %v432 = vld [vmem:[%s6] sm:$0x1]
  %v434 = vlaneseq
  %v435 = vshrl.u32 %v434, 7
  %v436 = vsub.s32 0, %v435
  %v437 = vrot.slane %v432, %v436
  %v440 = vsel %vm153, %v402, 0
  %v443 = vsel %vm153, %v403, 0
  %445 = vmatprep.subr.mxu0 0.0
  %446 = vmatpush1.msra.mxu0 %v419
  %447 = vmatprep.subr.mxu0 0.0
  %448 = vmatpush1.msra.mxu0 %v418
  %449 = vmatprep.subr.mxu0 0.0
  %450 = vmatpush1.msra.mxu0 %v417
  %451 = vmatprep.subr.mxu0 0.0
  %452 = vmatpush1.msra.mxu0 %v416
  %453 = vmatprep.subr.mxu0 0.0
  %454 = vmatpush1.msra.mxu0 %v415
  %455 = vmatprep.subr.mxu0 0.0
  %456 = vmatpush1.msra.mxu0 %v414
  %457 = vmatprep.subr.mxu0 0.0
  %458 = vmatpush1.msra.mxu0 %v413
  %459 = vmatprep.subr.mxu0 0.0
  %460 = vmatpush1.msra.mxu0 %v412
  %461 = vmatprep.subr.mxu0 0.0
  %462 = vmatpush1.msra.mxu0 %v411
  %463 = vmatprep.subr.mxu0 0.0
  %464 = vmatpush1.msra.mxu0 %v410
  %465 = vmatprep.subr.mxu0 0.0
  %466 = vmatpush1.msra.mxu0 %v409
  %467 = vmatprep.subr.mxu0 0.0
  %468 = vmatpush1.msra.mxu0 %v408
  %469 = vmatprep.subr.mxu0 0.0
  %470 = vmatpush1.msra.mxu0 %v407
  %471 = vmatprep.subr.mxu0 0.0
  %472 = vmatpush1.msra.mxu0 %v406
  %473 = vmatprep.subr.mxu0 0.0
  %474 = vmatpush1.msra.mxu0 %v405
  %475 = vmatprep.subr.mxu0 0.0
  %476 = vmatpush1.msra.mxu0 %v404
  %477 = vmatprep.subr.mxu0 0.0
  %478 = vmatpush2.msra.mxu0 0.0
  %479 = vmatprep.subr.mxu0 0.0
  %480 = vmatpush2.msra.mxu0 0.0
  %481 = vmatprep.subr.mxu0 0.0
  %482 = vmatpush2.msra.mxu0 0.0
  %483 = vmatprep.subr.mxu0 0.0
  %484 = vmatpush2.msra.mxu0 0.0
  %485 = vmatprep.subr.mxu0 0.0
  %486 = vmatpush2.msra.mxu0 %v431
  %487 = vmatprep.subr.mxu0 0.0
  %488 = vmatpush2.msra.mxu0 %v430
  %489 = vmatprep.subr.mxu0 0.0
  %490 = vmatpush2.msra.mxu0 %v429
  %491 = vmatprep.subr.mxu0 0.0
  %492 = vmatpush2.msra.mxu0 %v428
  %493 = vmatprep.subr.mxu0 0.0
  %494 = vmatpush2.msra.mxu0 %v427
  %495 = vmatprep.subr.mxu0 0.0
  %496 = vmatpush2.msra.mxu0 %v426
  %497 = vmatprep.subr.mxu0 0.0
  %498 = vmatpush2.msra.mxu0 %v425
  %499 = vmatprep.subr.mxu0 0.0
  %500 = vmatpush2.msra.mxu0 %v424
  %501 = vmatprep.subr.mxu0 0.0
  %502 = vmatpush2.msra.mxu0 %v423
  %503 = vmatprep.subr.mxu0 0.0
  %504 = vmatpush2.msra.mxu0 %v422
  %505 = vmatprep.subr.mxu0 0.0
  %506 = vmatpush2.msra.mxu0 %v421
  %507 = vmatprep.subr.mxu0 0.0
  %508 = vmatpush2.msra.mxu0 %v420
  %509 = vmatprep.mubr.f32.mxu0 %v440
  %510 = vmatmul.mubr.f32.gmra.mxu0 %v398
  %v511 = vpop.f32.mrf.mxu0
  %v512 = vadd.f32 %v437, %v511
  %v513 = vpop.f32.mrf.mxu0
  %514 = vmatprep.mubr.f32.mxu0 %v443
  %515 = vmatmul.mubr.f32.gmra.mxu0 %v399
  %v516 = vpop.f32.mrf.mxu0
  %v517 = vadd.f32 %v437, %v516
  %v518 = vpop.f32.mrf.mxu0
  %519 = vdwg.mxu0
  %v520 = vld [vmem:[%s7] sm:$0x1]
  %v521 = vld [vmem:[%s8] sm:$0x1]
  %v522 = vsel %vm141, %v512, 0.0
  %v523 = vsel %vm141, %v517, 0.0
  %v524 = vadd.f32 %v522, %v523
  %v525 = vrot.slane %v524, 4
  %v526 = vadd.f32 %v524, %v525
  %v527 = vrot.slane %v526, 2
  %v528 = vadd.f32 %v526, %v527
  %v529 = vrot.slane %v528, 1
  %v530 = vadd.f32 %v528, %v529
  %v531 = vmul.f32 %v530, %v270
  %v532 = vsub.f32 %v512, %v531
  %v533 = vsub.f32 %v517, %v531
  %v534 = vmul.f32 %v532, %v532
  %v535 = vmul.f32 %v533, %v533
  %v536 = vsel %vm141, %v534, 0.0
  %v537 = vsel %vm141, %v535, 0.0
  %v538 = vadd.f32 %v536, %v537
  %v539 = vrot.slane %v538, 4
  %v540 = vadd.f32 %v538, %v539
  %v541 = vrot.slane %v540, 2
  %v542 = vadd.f32 %v540, %v541
  %v543 = vrot.slane %v542, 1
  %v544 = vadd.f32 %v542, %v543
  %v545 = vmul.f32 %v544, %v270
  %v546 = vadd.f32 %v545, 1e-05
  %v547 = vrsqrt.pop %v546
  %v548 = vmul.f32 %v532, %v547
  %v549 = vmul.f32 %v533, %v547
  %v551 = vlaneseq
  %v552 = vshrl.u32 %v551, 7
  %v553 = vsub.s32 0, %v552
  %v554 = vrot.slane %v520, %v553
  %v556 = vmul.f32 %v548, %v554
  %v557 = vmul.f32 %v549, %v554
  %v559 = vlaneseq
  %v560 = vshrl.u32 %v559, 7
  %v561 = vsub.s32 0, %v560
  %v562 = vrot.slane %v521, %v561
  %v564 = vadd.f32 %v556, %v562
  %v565 = vadd.f32 %v557, %v562
  %vm566 = vcmp.gt.f32.partialorder %v564, 0.0
  %vm567 = vcmp.gt.f32.partialorder %v565, 0.0
  %v568 = vmul.f32 %v564, 0.2
  %v569 = vmul.f32 %v565, 0.2
  %v570 = vsel %vm566, %v564, %v568
  %v571 = vsel %vm567, %v565, %v569
  %v574 = vrot.slane %v570, 7
  %v575 = vrot.slane %v571, 7
  %vm578 = vcmask 1040384
  %v579 = vsel %vm578, 0.0, %v574
  %v580 = vsel %vm578, 0.0, %v575
  %v581 = vsel %vm578, %v574, 0.0
  %v582 = vsel %vm578, %v575, 0.0
  %v587 = vrot.slane %v579, 1
  %v588 = vrot.slane %v581, 1
  %v589 = vsel %vm61, %v587, %v588
  %v590 = vrot.slane %v580, 1
  %v591 = vrot.slane %v582, 1
  %v592 = vsel %vm61, %v590, %v591
  %593 = vrot.lane.b32.xlu0 %v589, 32
  %v594 = vpop.permute.xlu0 %593
  %595 = vrot.lane.b32.xlu0 %v592, 32
  %v596 = vpop.permute.xlu0 %595
  %v599 = vrot.slane %v579, 2
  %v600 = vrot.slane %v581, 2
  %v601 = vsel %vm74, %v599, %v600
  %v602 = vrot.slane %v580, 2
  %v603 = vrot.slane %v582, 2
  %v604 = vsel %vm74, %v602, %v603
  %605 = vrot.lane.b32.xlu0 %v601, 64
  %v606 = vpop.permute.xlu0 %605
  %607 = vrot.lane.b32.xlu0 %v604, 64
  %v608 = vpop.permute.xlu0 %607
  %v611 = vrot.slane %v579, 3
  %v612 = vrot.slane %v581, 3
  %v613 = vsel %vm87, %v611, %v612
  %v614 = vrot.slane %v580, 3
  %v615 = vrot.slane %v582, 3
  %v616 = vsel %vm87, %v614, %v615
  %617 = vrot.lane.b32.xlu0 %v613, 96
  %v618 = vpop.permute.xlu0 %617
  %619 = vrot.lane.b32.xlu0 %v616, 96
  %v620 = vpop.permute.xlu0 %619
  %v623 = vsel %vm141, %v579, %v594
  %v624 = vsel %vm141, %v580, %v596
  %v625 = vsel %vm147, %v623, %v606
  %v626 = vsel %vm147, %v624, %v608
  %v627 = vsel %vm153, %v625, %v618
  %v628 = vsel %vm153, %v626, %v620
  %v629 = vld [vmem:[%s9] sm:$0xff]
  %v630 = vld [vmem:[%s9 + $0x8] sm:$0xff]
  %v631 = vld [vmem:[%s9 + $0x10] sm:$0xff]
  %v632 = vld [vmem:[%s9 + $0x18] sm:$0xff]
  %v633 = vld [vmem:[%s9 + $0x20] sm:$0xff]
  %v634 = vld [vmem:[%s9 + $0x28] sm:$0xff]
  %v635 = vld [vmem:[%s9 + $0x30] sm:$0xff]
  %v636 = vld [vmem:[%s9 + $0x38] sm:$0xff]
  %v637 = vld [vmem:[%s9 + $0x40] sm:$0xff]
  %v638 = vld [vmem:[%s9 + $0x48] sm:$0xff]
  %v639 = vld [vmem:[%s9 + $0x50] sm:$0xff]
  %v640 = vld [vmem:[%s9 + $0x58] sm:$0xff]
  %v641 = vld [vmem:[%s9 + $0x60] sm:$0xff]
  %v642 = vld [vmem:[%s9 + $0x68] sm:$0xff]
  %v643 = vld [vmem:[%s9 + $0x70] sm:$0xff]
  %v644 = vld [vmem:[%s9 + $0x78] sm:$0xff]
  %v645 = vld [vmem:[%s10] sm:$0x1]
  %v647 = vlaneseq
  %v648 = vshrl.u32 %v647, 7
  %v649 = vsub.s32 0, %v648
  %v650 = vrot.slane %v645, %v649
  %652 = vmatprep.subr.mxu0 0.0
  %653 = vmatpush1.msra.mxu0 %v644
  %654 = vmatprep.subr.mxu0 0.0
  %655 = vmatpush1.msra.mxu0 %v643
  %656 = vmatprep.subr.mxu0 0.0
  %657 = vmatpush1.msra.mxu0 %v642
  %658 = vmatprep.subr.mxu0 0.0
  %659 = vmatpush1.msra.mxu0 %v641
  %660 = vmatprep.subr.mxu0 0.0
  %661 = vmatpush1.msra.mxu0 %v640
  %662 = vmatprep.subr.mxu0 0.0
  %663 = vmatpush1.msra.mxu0 %v639
  %664 = vmatprep.subr.mxu0 0.0
  %665 = vmatpush1.msra.mxu0 %v638
  %666 = vmatprep.subr.mxu0 0.0
  %667 = vmatpush1.msra.mxu0 %v637
  %668 = vmatprep.subr.mxu0 0.0
  %669 = vmatpush1.msra.mxu0 %v636
  %670 = vmatprep.subr.mxu0 0.0
  %671 = vmatpush1.msra.mxu0 %v635
  %672 = vmatprep.subr.mxu0 0.0
  %673 = vmatpush1.msra.mxu0 %v634
  %674 = vmatprep.subr.mxu0 0.0
  %675 = vmatpush1.msra.mxu0 %v633
  %676 = vmatprep.subr.mxu0 0.0
  %677 = vmatpush1.msra.mxu0 %v632
  %678 = vmatprep.subr.mxu0 0.0
  %679 = vmatpush1.msra.mxu0 %v631
  %680 = vmatprep.subr.mxu0 0.0
  %681 = vmatpush1.msra.mxu0 %v630
  %682 = vmatprep.subr.mxu0 0.0
  %683 = vmatpush1.msra.mxu0 %v629
  %684 = vmatprep.subr.mxu0 0.0
  %685 = vmatpush2.msra.mxu0 0.0
  %686 = vmatprep.subr.mxu0 0.0
  %687 = vmatpush2.msra.mxu0 0.0
  %688 = vmatprep.subr.mxu0 0.0
  %689 = vmatpush2.msra.mxu0 0.0
  %690 = vmatprep.subr.mxu0 0.0
  %691 = vmatpush2.msra.mxu0 0.0
  %692 = vmatprep.subr.mxu0 0.0
  %693 = vmatpush2.msra.mxu0 0.0
  %694 = vmatprep.subr.mxu0 0.0
  %695 = vmatpush2.msra.mxu0 0.0
  %696 = vmatprep.subr.mxu0 0.0
  %697 = vmatpush2.msra.mxu0 0.0
  %698 = vmatprep.subr.mxu0 0.0
  %699 = vmatpush2.msra.mxu0 0.0
  %700 = vmatprep.subr.mxu0 0.0
  %701 = vmatpush2.msra.mxu0 0.0
  %702 = vmatprep.subr.mxu0 0.0
  %703 = vmatpush2.msra.mxu0 0.0
  %704 = vmatprep.subr.mxu0 0.0
  %705 = vmatpush2.msra.mxu0 0.0
  %706 = vmatprep.subr.mxu0 0.0
  %707 = vmatpush2.msra.mxu0 0.0
  %708 = vmatprep.subr.mxu0 0.0
  %709 = vmatpush2.msra.mxu0 0.0
  %710 = vmatprep.subr.mxu0 0.0
  %711 = vmatpush2.msra.mxu0 0.0
  %712 = vmatprep.subr.mxu0 0.0
  %713 = vmatpush2.msra.mxu0 0.0
  %714 = vmatprep.subr.mxu0 0.0
  %715 = vmatpush2.msra.mxu0 0.0
  %716 = vmatprep.mubr.f32.mxu0 0.0
  %717 = vmatmul.mubr.f32.gmra.mxu0 %v627
  %v718 = vpop.f32.mrf.mxu0
  %v719 = vadd.f32 %v650, %v718
  %v720 = vpop.f32.mrf.mxu0
  %721 = vmatprep.mubr.f32.mxu0 0.0
  %722 = vmatmul.mubr.f32.gmra.mxu0 %v628
  %v723 = vpop.f32.mrf.mxu0
  %v724 = vadd.f32 %v650, %v723
  %v725 = vpop.f32.mrf.mxu0
  %726 = vdwg.mxu0
  %v727 = vsel %vm138, %v719, 0.0
  %v728 = vsel %vm138, %v724, 0.0
  %v729 = vadd.f32 %v727, %v728
  %v730 = vrot.slane %v729, 4
  %v731 = vadd.f32 %v729, %v730
  %v732 = vrot.slane %v731, 2
  %v733 = vadd.f32 %v731, %v732
  %v734 = vrot.slane %v733, 1
  %v735 = vadd.f32 %v733, %v734
  %v736 = vmul.f32 %v735, %v270
  %vm737 = vcmask 261248
  %v738 = vsel %vm737, %v719, 0.0
  %v739 = vsel %vm737, %v724, 0.0
  %v740 = vadd.f32 %v738, %v739
  %v741 = vrot.slane %v740, 4
  %v742 = vadd.f32 %v740, %v741
  %v743 = vrot.slane %v742, 2
  %v744 = vadd.f32 %v742, %v743
  %v745 = vrot.slane %v744, 1
  %v746 = vadd.f32 %v744, %v745
  %v747 = vmul.f32 %v746, %v270
  %749 = vrot.lane.b32.xlu0 %v747, 112
  %v750 = vpop.permute.xlu0 %749
  %v752 = vadd.f32 %v736, %v750
  %v753 = vmul.f32 %v752, 0.5
  %v754 = vlaneseq
  %v755 = vshrl.u32 %v754, 7
  %v756 = vsub.s32 0, %v755
  %v757 = vrot.slane %v753, %v756
  %v758 = vsub.f32 %v719, %v757
  %v759 = vsub.f32 %v724, %v757
  %v760 = vmul.f32 %v758, %v758
  %v761 = vmul.f32 %v759, %v759
  %v762 = vsel %vm138, %v760, 0.0
  %v763 = vsel %vm138, %v761, 0.0
  %v764 = vadd.f32 %v762, %v763
  %v765 = vrot.slane %v764, 4
  %v766 = vadd.f32 %v764, %v765
  %v767 = vrot.slane %v766, 2
  %v768 = vadd.f32 %v766, %v767
  %v769 = vrot.slane %v768, 1
  %v770 = vadd.f32 %v768, %v769
  %v771 = vmul.f32 %v770, %v270
  %773 = vrot.lane.b32.xlu0 %v757, 16
  %v774 = vpop.permute.xlu0 %773
  %v776 = vsub.f32 %v719, %v774
  %v777 = vsub.f32 %v724, %v774
  %v778 = vmul.f32 %v776, %v776
  %v779 = vmul.f32 %v777, %v777
  %v780 = vsel %vm737, %v778, 0.0
  %v781 = vsel %vm737, %v779, 0.0
  %v782 = vadd.f32 %v780, %v781
  %v783 = vrot.slane %v782, 4
  %v784 = vadd.f32 %v782, %v783
  %v785 = vrot.slane %v784, 2
  %v786 = vadd.f32 %v784, %v785
  %v787 = vrot.slane %v786, 1
  %v788 = vadd.f32 %v786, %v787
  %v789 = vmul.f32 %v788, %v270
  %791 = vrot.lane.b32.xlu0 %v789, 112
  %v792 = vpop.permute.xlu0 %791
  %v794 = vadd.f32 %v771, %v792
  %v795 = vmul.f32 %v794, 0.5
  %v796 = vadd.f32 %v795, 1e-05
  %v797 = vrsqrt.pop %v796
  %v798 = vld [vmem:[%s11] sm:$0x1]
  %v799 = vmul.f32 %v797, %v798
  %v800 = vld [vmem:[%s12] sm:$0x1]
  %v801 = vmul.f32 %v753, %v799
  %v802 = vsub.f32 %v800, %v801
  %804 = vrot.lane.b32.xlu0 %v799, 16
  %v805 = vpop.permute.xlu0 %804
  %v807 = vsel %vm138, %v799, %v805
  %v809 = vlaneseq
  %v810 = vshrl.u32 %v809, 7
  %v811 = vsub.s32 0, %v810
  %v812 = vrot.slane %v802, %v811
  %813 = vrot.lane.b32.xlu0 %v812, 16
  %v814 = vpop.permute.xlu0 %813
  %v816 = vsel %vm138, %v802, %v814
  %v817 = vlaneseq
  %v818 = vshrl.u32 %v817, 7
  %v819 = vsub.s32 0, %v818
  %v820 = vrot.slane %v807, %v819
  %v821 = vmul.f32 %v719, %v820
  %v822 = vmul.f32 %v724, %v820
  %v823 = vlaneseq
  %v824 = vshrl.u32 %v823, 7
  %v825 = vsub.s32 0, %v824
  %v826 = vrot.slane %v816, %v825
  %v827 = vadd.f32 %v821, %v826
  %v828 = vadd.f32 %v822, %v826
  %vm829 = vcmp.gt.f32.partialorder %v827, 0.0
  %vm830 = vcmp.gt.f32.partialorder %v828, 0.0
  %v831 = vmul.f32 %v827, 0.2
  %v832 = vmul.f32 %v828, 0.2
  %v833 = vsel %vm829, %v827, %v831
  %v834 = vsel %vm830, %v828, %v832
  %835 = vst.msk [vmem:[%s13] sm:$0xff] %vm141, %v833
  %836 = vst.msk [vmem:[%s13 + $0x8] sm:$0xff] %vm141, %v834
  // Predicated region
  $region54: #{upsample_pallas.1} parent=0 // pred_check
    _
  $region55: #{upsample_pallas.1} parent=0 // pred_check_branch
    %838 = sbr.rel (0) target = $region57
  $region56: #{upsample_pallas.1} parent=0 // pred_region
    _
  $region57: #{upsample_pallas.1} parent=0 // pred_fallthru
    _
  // Predicated region
  $region58: #{upsample_pallas.1} parent=0 // pred_check
    _
  $region59: #{upsample_pallas.1} parent=0 // pred_check_branch
    %840 = sbr.rel (0) target = $region61
  $region60: #{upsample_pallas.1} parent=0 // pred_region
    _
  $region61: #{upsample_pallas.1} parent=0 // pred_fallthru
    _

</llo_original>
